<compile_context>
chip_gen: v5e
topology: v5e:2x2
jax: 0.10.0
libtpu: 0.0.40
codegen_flags: <defaults>
</compile_context>

<pallas_src>
import functools
import math

import jax
import jax.numpy as jnp
from jax import lax
from jax.experimental import pallas as pl
from jax.experimental.pallas import tpu as pltpu

_MB = 1024 * 1024


def _vmem_capacity_bytes():
    """Physical VMEM per core; falls back to the v7x 64 MiB lower bound."""
    try:
        cap = int(pltpu.get_tpu_info().vmem_capacity_bytes)
        if cap > 0:
            return cap
    except Exception:
        pass
    return 64 * _MB


# ---------------------------------------------------------------------------
# Main path: whole reduction axis resident per row tile.
# ---------------------------------------------------------------------------
def _gn_row_kernel(x_ref, gamma_ref, beta_ref, o_ref, *, eps, reps):
    # x_ref: (T, D)   one (sample, group) row per sublane row
    # gamma_ref / beta_ref: (R, D) with T == reps * R and R a multiple of 8
    # (or R == T when reps == 1), so the broadcast below is layout-clean.
    x = x_ref[...].astype(jnp.float32)
    inv_d = jnp.float32(1.0 / x.shape[-1])
    mean = jnp.sum(x, axis=-1, keepdims=True) * inv_d        # (T, 1)
    centered = x - mean
    var = jnp.sum(centered * centered, axis=-1, keepdims=True) * inv_d
    scaled = centered * lax.rsqrt(var + eps)                 # (T, D)

    gamma = gamma_ref[...].astype(jnp.float32)
    beta = beta_ref[...].astype(jnp.float32)
    if reps > 1:
        r, d = gamma.shape
        y = scaled.reshape(reps, r, d) * gamma[None] + beta[None]
        o_ref[...] = y.reshape(reps * r, d).astype(o_ref.dtype)
    else:
        o_ref[...] = (scaled * gamma + beta).astype(o_ref.dtype)


def _choose_row_tile(ng, unit, rows_budget):
    """Row-tile size: multiple of `unit` (= lcm(G, 8)) or the full extent."""
    if ng <= unit:
        return ng
    max_rows = (min(rows_budget, ng) // unit) * unit
    max_rows = max(max_rows, unit)
    # Keep >= 2 grid steps when the row axis is splittable (v7x megacore).
    if max_rows >= ng and ng >= 2 * unit:
        max_rows = max(unit, ((ng // 2) // unit) * unit)
    # Prefer a tile that divides NG exactly (no ragged last block).
    t = max_rows
    for _ in range(128):
        if t <= 0:
            break
        if ng % t == 0:
            return t
        t -= unit
    return max_rows


# ---------------------------------------------------------------------------
# Fallback path: reduction axis tiled (huge Cg*H*W).
# ---------------------------------------------------------------------------
def _gn_stats_kernel(x_ref, mean_ref, rstd_ref, sum_ref, sq_ref, *,
                     eps, d_true, tile_d):
    j = pl.program_id(1)

    @pl.when(j == 0)
    def _():
        sum_ref[...] = jnp.zeros_like(sum_ref)
        sq_ref[...] = jnp.zeros_like(sq_ref)

    x = x_ref[...].astype(jnp.float32)
    if d_true % tile_d != 0:
        # Mask the ragged final column block (out-of-range lanes hold garbage).
        col = j * tile_d + lax.broadcasted_iota(jnp.int32, x.shape, 1)
        x = jnp.where(col < d_true, x, 0.0)
    sum_ref[...] += jnp.sum(x, axis=-1, keepdims=True)
    sq_ref[...] += jnp.sum(x * x, axis=-1, keepdims=True)

    @pl.when(j == pl.num_programs(1) - 1)
    def _():
        inv_d = jnp.float32(1.0 / d_true)
        mean = sum_ref[...] * inv_d
        var = jnp.maximum(sq_ref[...] * inv_d - mean * mean, 0.0)
        mean_ref[...] = mean
        rstd_ref[...] = lax.rsqrt(var + eps)


def _gn_apply_kernel(x_ref, mean_ref, rstd_ref, gamma_ref, beta_ref, o_ref, *, reps):
    x = x_ref[...].astype(jnp.float32)
    scaled = (x - mean_ref[...]) * rstd_ref[...]
    gamma = gamma_ref[...].astype(jnp.float32)
    beta = beta_ref[...].astype(jnp.float32)
    if reps > 1:
        gamma = jnp.concatenate([gamma] * reps, axis=0)
        beta = jnp.concatenate([beta] * reps, axis=0)
    o_ref[...] = (scaled * gamma + beta).astype(o_ref.dtype)


def _group_norm_split_d(x2, gamma_gd, beta_gd, *, eps, G, unit, itemsize,
                        budget, vmem_limit):
    NG, D = x2.shape
    tile_r = NG if NG <= unit else unit
    # Per-column VMEM cost (x/out double buffers + f32 temps + gamma/beta blocks).
    col_bytes = (tile_r + 2 * G) * (4 * itemsize + 16)
    avail = max(budget - 2 * _MB, 0)
    tile_d = max(((avail // col_bytes) // 128) * 128, 128)
    if tile_d >= D:
        tile_d = D
    grid = (pl.cdiv(NG, tile_r), pl.cdiv(D, tile_d))

    stats_kernel = functools.partial(
        _gn_stats_kernel, eps=float(eps), d_true=D, tile_d=tile_d)
    mean, rstd = pl.pallas_call(
        stats_kernel,
        out_shape=(jax.ShapeDtypeStruct((NG, 1), jnp.float32),
                   jax.ShapeDtypeStruct((NG, 1), jnp.float32)),
        grid_spec=pltpu.PrefetchScalarGridSpec(
            num_scalar_prefetch=0,
            grid=grid,
            in_specs=[pl.BlockSpec((tile_r, tile_d), lambda i, j: (i, j))],
            out_specs=(pl.BlockSpec((tile_r, 1), lambda i, j: (i, 0)),
                       pl.BlockSpec((tile_r, 1), lambda i, j: (i, 0))),
            scratch_shapes=[pltpu.VMEM((tile_r, 1), jnp.float32),
                            pltpu.VMEM((tile_r, 1), jnp.float32)],
        ),
        compiler_params=pltpu.CompilerParams(
            dimension_semantics=("parallel", "arbitrary"),
            vmem_limit_bytes=int(vmem_limit),
        ),
    )(x2)

    apply_kernel = functools.partial(_gn_apply_kernel, reps=tile_r // G)
    out2 = pl.pallas_call(
        apply_kernel,
        out_shape=jax.ShapeDtypeStruct((NG, D), x2.dtype),
        grid_spec=pltpu.PrefetchScalarGridSpec(
            num_scalar_prefetch=0,
            grid=grid,
            in_specs=[
                pl.BlockSpec((tile_r, tile_d), lambda i, j: (i, j)),
                pl.BlockSpec((tile_r, 1), lambda i, j: (i, 0)),
                pl.BlockSpec((tile_r, 1), lambda i, j: (i, 0)),
                pl.BlockSpec((G, tile_d), lambda i, j: (0, j)),
                pl.BlockSpec((G, tile_d), lambda i, j: (0, j)),
            ],
            out_specs=pl.BlockSpec((tile_r, tile_d), lambda i, j: (i, j)),
        ),
        compiler_params=pltpu.CompilerParams(
            dimension_semantics=("parallel", "parallel"),
            vmem_limit_bytes=int(vmem_limit),
        ),
    )(x2, mean, rstd, gamma_gd, beta_gd)
    return out2


# ---------------------------------------------------------------------------
# Public wrapper: F.group_norm(x, num_groups, weight, bias, eps), x in NCHW.
# ---------------------------------------------------------------------------
def meta_group_norm(x, weight, bias, num_groups, eps=1e-5, *,
                    tile_budget_bytes=None):
    N, C, H, W = x.shape
    G = int(num_groups)
    assert C % G == 0, "num_channels must be divisible by num_groups"
    Cg = C // G
    HW = H * W
    D = Cg * HW
    NG = N * G

    if weight is None:
        weight = jnp.ones((C,), x.dtype)
    if bias is None:
        bias = jnp.zeros((C,), x.dtype)

    x2 = x.reshape(NG, D)                                    # free, lane-dense view
    # Per-group, per-element affine tables (small: G rows).
    gamma_gd = jnp.broadcast_to(weight.reshape(G, Cg, 1), (G, Cg, HW)).reshape(G, D)
    beta_gd = jnp.broadcast_to(bias.reshape(G, Cg, 1), (G, Cg, HW)).reshape(G, D)

    itemsize = x.dtype.itemsize
    vmem_cap = _vmem_capacity_bytes()                        # 128 MiB v5e/v6e, 64 MiB v7x
    vmem_limit = min((vmem_cap * 3) // 4, 100 * _MB)         # ~96 MiB / ~48 MiB
    budget = vmem_limit if tile_budget_bytes is None else int(tile_budget_bytes)

    unit = (G * 8) // math.gcd(G, 8)                         # lcm(G, 8)
    # Per-row VMEM cost: 2x in + 2x out pipelined buffers plus ~4 f32 temps.
    bytes_per_row = D * (4 * itemsize + 16)
    table_bytes = 2 * 2 * min(unit, NG) * D * 4              # gamma+beta blocks
    usable = budget - table_bytes - 2 * _MB

    if usable < bytes_per_row * min(unit, NG):
        # Even a minimal row tile doesn't fit: tile the reduction axis instead.
        out2 = _group_norm_split_d(
            x2, gamma_gd, beta_gd, eps=eps, G=G, unit=unit,
            itemsize=itemsize, budget=budget, vmem_limit=vmem_limit)
        return out2.reshape(N, C, H, W)

    rows_budget = max(1, usable // bytes_per_row)
    tile_ng = _choose_row_tile(NG, unit, rows_budget)
    r_tab = min(unit, tile_ng)                               # affine-table rows
    reps = tile_ng // r_tab
    assert tile_ng % r_tab == 0 and r_tab % G == 0

    gamma_t = jnp.tile(gamma_gd, (r_tab // G, 1))            # (r_tab, D): tiny, fetched once
    beta_t = jnp.tile(beta_gd, (r_tab // G, 1))

    kernel = functools.partial(_gn_row_kernel, eps=float(eps), reps=reps)
    out2 = pl.pallas_call(
        kernel,
        out_shape=jax.ShapeDtypeStruct((NG, D), x.dtype),
        grid_spec=pltpu.PrefetchScalarGridSpec(
            num_scalar_prefetch=0,
            grid=(pl.cdiv(NG, tile_ng),),
            in_specs=[
                pl.BlockSpec((tile_ng, D), lambda i: (i, 0)),
                pl.BlockSpec((r_tab, D), lambda i: (0, 0)),   # constant: fetched once
                pl.BlockSpec((r_tab, D), lambda i: (0, 0)),
            ],
            out_specs=pl.BlockSpec((tile_ng, D), lambda i: (i, 0)),
        ),
        compiler_params=pltpu.CompilerParams(
            dimension_semantics=("parallel",),               # rows are independent
            vmem_limit_bytes=int(vmem_limit),
        ),
    )(x2, gamma_t, beta_t)
    return out2.reshape(N, C, H, W)


def _group_norm_ref(x, weight, bias, num_groups, eps=1e-5):
    """Pure-JAX reference (same semantics as F.group_norm)."""
    N, C, H, W = x.shape
    xr = x.reshape(N, num_groups, -1).astype(jnp.float32)
    mean = xr.mean(axis=-1, keepdims=True)
    var = ((xr - mean) ** 2).mean(axis=-1, keepdims=True)
    y = ((xr - mean) * lax.rsqrt(var + eps)).reshape(N, C, H, W)
    y = y * weight.reshape(1, C, 1, 1) + bias.reshape(1, C, 1, 1)
    return y.astype(x.dtype)


if __name__ == "__main__":
    # Module config: GroupNorm(num_groups=2, num_channels=4), default eps.
    num_groups, num_channels, eps = 2, 4, 1e-5

    key = jax.random.PRNGKey(0)
    kx, kw, kb = jax.random.split(key, 3)
    N, C, H, W = 2, num_channels, 16, 16
    x = jax.random.normal(kx, (N, C, H, W), dtype=jnp.float32)
    # nn.GroupNorm inits weight=1, bias=0; perturb so the affine path is exercised.
    weight = 1.0 + 0.1 * jax.random.normal(kw, (C,), dtype=jnp.float32)
    bias = 0.1 * jax.random.normal(kb, (C,), dtype=jnp.float32)

    out = jax.block_until_ready(meta_group_norm(x, weight, bias, num_groups, eps))
    ref = _group_norm_ref(x, weight, bias, num_groups, eps)
    assert out.shape == (N, C, H, W)
    assert jnp.allclose(out, ref, atol=1e-5, rtol=1e-5), "main path mismatch"

    # Coverage: multi-step grid, in-kernel gamma broadcast (reps>1), D % 128 != 0.
    k2x, k2w, k2b = jax.random.split(jax.random.PRNGKey(1), 3)
    N2, C2, G2, H2, W2 = 16, 8, 4, 6, 6
    x2 = jax.random.normal(k2x, (N2, C2, H2, W2), dtype=jnp.float32)
    w2 = 1.0 + 0.1 * jax.random.normal(k2w, (C2,), dtype=jnp.float32)
    b2 = 0.1 * jax.random.normal(k2b, (C2,), dtype=jnp.float32)
    out2 = jax.block_until_ready(meta_group_norm(x2, w2, b2, G2, eps))
    assert jnp.allclose(out2, _group_norm_ref(x2, w2, b2, G2, eps),
                        atol=1e-5, rtol=1e-5), "tiled row path mismatch"

    # Coverage: force the column-split (huge Cg*H*W) fallback path.
    k3x, k3w, k3b = jax.random.split(jax.random.PRNGKey(2), 3)
    N3, C3, G3, H3, W3 = 2, 4, 2, 30, 30
    x3 = jax.random.normal(k3x, (N3, C3, H3, W3), dtype=jnp.float32)
    w3 = 1.0 + 0.1 * jax.random.normal(k3w, (C3,), dtype=jnp.float32)
    b3 = 0.1 * jax.random.normal(k3b, (C3,), dtype=jnp.float32)
    out3 = jax.block_until_ready(
        meta_group_norm(x3, w3, b3, G3, eps, tile_budget_bytes=64 * 1024))
    assert jnp.allclose(out3, _group_norm_ref(x3, w3, b3, G3, eps),
                        atol=1e-4, rtol=1e-4), "column-split path mismatch"

    print("KERNEL_OK")
</pallas_src>

<mosaic_0001>
module attributes {stable_mosaic.version = 11 : i64} {
  func.func @_gn_row_kernel(%arg0: i32, %arg1: memref<4x512xf32, #tpu.memory_space<vmem>>, %arg2: memref<4x512xf32, #tpu.memory_space<vmem>>, %arg3: memref<4x512xf32, #tpu.memory_space<vmem>>, %arg4: memref<4x512xf32, #tpu.memory_space<vmem>>) attributes {dimension_semantics = [#tpu.dimension_semantics<parallel>], iteration_bounds = array<i64: 1>, scalar_prefetch = 0 : i64, scratch_operands = 0 : i64, tpu.core_type = #tpu.core_type<tc>, window_params = [{transform_indices = @transform_0, window_bounds = array<i64: 4, 512>}, {pipeline_mode = #tpu.pipeline_mode<synchronous>, transform_indices = @transform_1, window_bounds = array<i64: 4, 512>}, {pipeline_mode = #tpu.pipeline_mode<synchronous>, transform_indices = @transform_2, window_bounds = array<i64: 4, 512>}, {transform_indices = @transform_3, window_bounds = array<i64: 4, 512>}]} {
    %c0 = arith.constant 0 : index
    %c0_0 = arith.constant 0 : index
    %0 = vector.load %arg1[%c0, %c0_0] : memref<4x512xf32, #tpu.memory_space<vmem>>, vector<4x512xf32>
    %cst = arith.constant dense<0.000000e+00> : vector<4xf32>
    %1 = vector.multi_reduction <add>, %0, %cst [1] : vector<4x512xf32> to vector<4xf32>
    %2 = vector.shape_cast %1 : vector<4xf32> to vector<4x1xf32>
    %cst_1 = arith.constant 0.001953125 : f32
    %3 = vector.broadcast %cst_1 : f32 to vector<4x1xf32>
    %4 = arith.mulf %2, %3 : vector<4x1xf32>
    %5 = vector.broadcast %4 : vector<4x1xf32> to vector<4x512xf32>
    %6 = arith.subf %0, %5 : vector<4x512xf32>
    %7 = arith.mulf %6, %6 : vector<4x512xf32>
    %cst_2 = arith.constant dense<0.000000e+00> : vector<4xf32>
    %8 = vector.multi_reduction <add>, %7, %cst_2 [1] : vector<4x512xf32> to vector<4xf32>
    %9 = vector.shape_cast %8 : vector<4xf32> to vector<4x1xf32>
    %cst_3 = arith.constant 0.001953125 : f32
    %10 = vector.broadcast %cst_3 : f32 to vector<4x1xf32>
    %11 = arith.mulf %9, %10 : vector<4x1xf32>
    %cst_4 = arith.constant 9.99999974E-6 : f32
    %12 = vector.broadcast %cst_4 : f32 to vector<4x1xf32>
    %13 = arith.addf %11, %12 : vector<4x1xf32>
    %14 = math.rsqrt %13 : vector<4x1xf32>
    %15 = vector.broadcast %14 : vector<4x1xf32> to vector<4x512xf32>
    %16 = arith.mulf %6, %15 : vector<4x512xf32>
    %c0_5 = arith.constant 0 : index
    %c0_6 = arith.constant 0 : index
    %17 = vector.load %arg2[%c0_5, %c0_6] : memref<4x512xf32, #tpu.memory_space<vmem>>, vector<4x512xf32>
    %c0_7 = arith.constant 0 : index
    %c0_8 = arith.constant 0 : index
    %18 = vector.load %arg3[%c0_7, %c0_8] : memref<4x512xf32, #tpu.memory_space<vmem>>, vector<4x512xf32>
    %19 = arith.mulf %16, %17 : vector<4x512xf32>
    %20 = arith.addf %19, %18 : vector<4x512xf32>
    %c0_9 = arith.constant 0 : index
    %c0_10 = arith.constant 0 : index
    %21 = vector.load %arg4[%c0_9, %c0_10] : memref<4x512xf32, #tpu.memory_space<vmem>>, vector<4x512xf32>
    tpu.vector_store %arg4[%c0_9, %c0_10], %20 {strides = array<i32>} : memref<4x512xf32, #tpu.memory_space<vmem>>, vector<4x512xf32>,
    return
  }
  func.func @transform_0(%arg0: i32) -> (i32, i32) {
    %c0_i32 = arith.constant 0 : i32
    %c0_i32_0 = arith.constant 0 : i32
    return %arg0, %c0_i32 : i32, i32
  }
  func.func @transform_1(%arg0: i32) -> (i32, i32) {
    %c0_i32 = arith.constant 0 : i32
    %c0_i32_0 = arith.constant 0 : i32
    %c0_i32_1 = arith.constant 0 : i32
    return %c0_i32, %c0_i32_0 : i32, i32
  }
  func.func @transform_2(%arg0: i32) -> (i32, i32) {
    %c0_i32 = arith.constant 0 : i32
    %c0_i32_0 = arith.constant 0 : i32
    %c0_i32_1 = arith.constant 0 : i32
    return %c0_i32, %c0_i32_0 : i32, i32
  }
  func.func @transform_3(%arg0: i32) -> (i32, i32) {
    %c0_i32 = arith.constant 0 : i32
    %c0_i32_0 = arith.constant 0 : i32
    return %arg0, %c0_i32 : i32, i32
  }
}

</mosaic_0001>

<llo_original>
// kernel: tpu_custom_call.1
$region0: #{tpu_custom_call.1}
  #allocation0 [shape = 'u32[]', space=smem, size = 0x4, offset = 0x4, fixed_abs, tag = 'smem constant byte address 0x4 - core index']
  #allocation1 [shape = 'u32[72,128]{1,0:T(1,128)}', space=vmem, size = 0x9000, scoped, tag = 'internal scratch']
  %s0 = inlined_call_operand.hbm [shape: f32[4,512], index: 0, kind: input, shape index: {}]
  %s1 = inlined_call_operand.hbm [shape: f32[4,512], index: 1, kind: input, shape index: {}]
  %s2 = inlined_call_operand.hbm [shape: f32[4,512], index: 2, kind: input, shape index: {}]
  %s3 = inlined_call_operand.hbm [shape: f32[4,512], index: 3, kind: output, shape index: {}]
  %s4 = sld [smem:[#allocation0]]
  $region34: #{tpu_custom_call.1} parent=0
    _
  %s6 = ssub.s32 1, %s4
  %s7 = scalar_select 0, %s6, %s4
  $region1: #{tpu_custom_call.1} parent=0
    #allocation2 [shape = 'u8[8192]{0}', space=vmem, size = 0x2000, scoped, tag = 'input window, operand 0, single buffered']
    #allocation3 [shape = 's32[1]{0}', space=sflag, size = 0x4, scoped, tag = 'scoped memory for tpu_custom_call.1']
    #allocation4 [shape = 's32[1]{0}', space=sflag, size = 0x4, scoped, tag = 'scoped memory for tpu_custom_call.1']
    #allocation5 [shape = 'u8[8192]{0}', space=vmem, size = 0x2000, scoped, tag = 'input window, operand 1, single buffered']
    #allocation6 [shape = 's32[1]{0}', space=sflag, size = 0x4, scoped, tag = 'scoped memory for tpu_custom_call.1']
    #allocation7 [shape = 'u8[8192]{0}', space=vmem, size = 0x2000, scoped, tag = 'input window, operand 2, single buffered']
    #allocation8 [shape = 'u8[8192]{0}', space=vmem, size = 0x2000, scoped, tag = 'output window, operand 0, single buffered']
    %8 = vsyncpa [#allocation3], 0
    %9 = vsyncpa [#allocation6], 0
    %10 = vsyncpa [#allocation4], 0
    // Predicated region
    $region2: #{tpu_custom_call.1} parent=1 // pred_check
      _
    $region3: #{tpu_custom_call.1} parent=1 // pred_check_branch
      %12 = sbr.rel (0) target = $region5
    $region4: #{tpu_custom_call.1} parent=1 // pred_region
      %14 = vsyncadd [#allocation3], 0
      %s16 = sshll.u32 %s0, 4
      %s17 = int_to_ptr.hbm [resolvable:$true] %s16
      %s18 = sshll.u32 [#allocation2], 4
      %s19 = int_to_ptr.vmem [resolvable:$true] %s18
      %21 = dma.hbm_to_vmem [thread:$0]  %s17, 256, %s19, [#allocation3]
    $region5: #{tpu_custom_call.1} parent=1 // pred_fallthru
      _
    // Predicated region
    $region6: #{tpu_custom_call.1} parent=1 // pred_check
      _
    $region7: #{tpu_custom_call.1} parent=1 // pred_check_branch
      %23 = sbr.rel (0) target = $region9
    $region8: #{tpu_custom_call.1} parent=1 // pred_region
      %25 = vsyncadd [#allocation6], 0
      %s27 = sshll.u32 %s1, 4
      %s28 = int_to_ptr.hbm [resolvable:$true] %s27
      %s29 = sshll.u32 [#allocation5], 4
      %s30 = int_to_ptr.vmem [resolvable:$true] %s29
      %32 = dma.hbm_to_vmem [thread:$0]  %s28, 256, %s30, [#allocation6]
    $region9: #{tpu_custom_call.1} parent=1 // pred_fallthru
      _
    // Predicated region
    $region10: #{tpu_custom_call.1} parent=1 // pred_check
      _
    $region11: #{tpu_custom_call.1} parent=1 // pred_check_branch
      %34 = sbr.rel (0) target = $region13
    $region12: #{tpu_custom_call.1} parent=1 // pred_region
      %36 = vsyncadd [#allocation6], 0
      %s38 = sshll.u32 %s2, 4
      %s39 = int_to_ptr.hbm [resolvable:$true] %s38
      %s40 = sshll.u32 [#allocation7], 4
      %s41 = int_to_ptr.vmem [resolvable:$true] %s40
      %43 = dma.hbm_to_vmem [thread:$0]  %s39, 256, %s41, [#allocation6]
    $region13: #{tpu_custom_call.1} parent=1 // pred_fallthru
      _
    // Predicated region
    $region14: #{tpu_custom_call.1} parent=1 // pred_check
      _
    $region15: #{tpu_custom_call.1} parent=1 // pred_check_branch
      %45 = sbr.rel (0) target = $region17
    $region16: #{tpu_custom_call.1} parent=1 // pred_region
      %47 = dma.done [#allocation3], 256
    $region17: #{tpu_custom_call.1} parent=1 // pred_fallthru
      _
    // Predicated region
    $region18: #{tpu_custom_call.1} parent=1 // pred_check
      _
    $region19: #{tpu_custom_call.1} parent=1 // pred_check_branch
      %49 = sbr.rel (0) target = $region21
    $region20: #{tpu_custom_call.1} parent=1 // pred_region
      %51 = dma.done [#allocation6], 256
    $region21: #{tpu_custom_call.1} parent=1 // pred_fallthru
      _
    // Predicated region
    $region22: #{tpu_custom_call.1} parent=1 // pred_check
      _
    $region23: #{tpu_custom_call.1} parent=1 // pred_check_branch
      %53 = sbr.rel (0) target = $region25
    $region24: #{tpu_custom_call.1} parent=1 // pred_region
      %55 = dma.done [#allocation6], 256
    $region25: #{tpu_custom_call.1} parent=1 // pred_fallthru
      _
    %v56 = vld [vmem:[#allocation2] sm:$0xff]
    %v57 = vld [vmem:[#allocation2 + $0x8] sm:$0xff]
    %60 = vst [vmem:[#allocation1] ss:$2 sm:$0xff] %v56
    %s61 = scalar_lea.vmem [#allocation1], 16
    %62 = vst [vmem:[%s61] ss:$2 sm:$0xff] %v57
    %v63 = vld.sshfl [vmem:[#allocation1] sm:$0xff pattern:$0x75316420]
    %v64 = vld.sshfl [vmem:[#allocation1 + $0x8] sm:$0xff pattern:$0x75316420]
    %v65 = vld.sshfl [vmem:[#allocation1 + $0x10] sm:$0xff pattern:$0x75316420]
    %v66 = vld.sshfl [vmem:[#allocation1 + $0x18] sm:$0xff pattern:$0x75316420]
    %vm71 = vcmask 1043456
    %v72 = vsel %vm71, %v63, 0.0
    %v73 = vsel %vm71, %v64, 0.0
    %v74 = vadd.f32 %v72, %v73
    %v75 = vsel %vm71, %v65, 0.0
    %v76 = vadd.f32 %v74, %v75
    %v77 = vsel %vm71, %v66, 0.0
    %v78 = vadd.f32 %v76, %v77
    %79 = vadd.xlane.f32.xlu0 %v78
    %v80 = vpop.xlane.xlu0 %79
    %v81 = vmul.f32 %v80, 0.001953125
    %v84 = vunpack.c.l.s4 839922192
    %v85 = vunpack.c.0.s8 %v84
    %v86 = vperm.slane %v81, %v85
    %v88 = vsub.f32 %v56, %v86
    %v89 = vsub.f32 %v57, %v86
    %v90 = vmul.f32 %v88, %v88
    %v91 = vmul.f32 %v89, %v89
    %94 = vst [vmem:[#allocation1] ss:$2 sm:$0xff] %v90
    %s95 = scalar_lea.vmem [#allocation1], 16
    %96 = vst [vmem:[%s95] ss:$2 sm:$0xff] %v91
    %v97 = vld.sshfl [vmem:[#allocation1] sm:$0xff pattern:$0x75316420]
    %v98 = vld.sshfl [vmem:[#allocation1 + $0x8] sm:$0xff pattern:$0x75316420]
    %v99 = vld.sshfl [vmem:[#allocation1 + $0x10] sm:$0xff pattern:$0x75316420]
    %v100 = vld.sshfl [vmem:[#allocation1 + $0x18] sm:$0xff pattern:$0x75316420]
    %v105 = vsel %vm71, %v97, 0.0
    %v106 = vsel %vm71, %v98, 0.0
    %v107 = vadd.f32 %v105, %v106
    %v108 = vsel %vm71, %v99, 0.0
    %v109 = vadd.f32 %v107, %v108
    %v110 = vsel %vm71, %v100, 0.0
    %v111 = vadd.f32 %v109, %v110
    %112 = vadd.xlane.f32.xlu0 %v111
    %v113 = vpop.xlane.xlu0 %112
    %v114 = vmul.f32 %v113, 0.001953125
    %v115 = vadd.f32 %v114, 1e-05
    %v116 = vrsqrt.pop %v115
    %v117 = vmul.f32 %v116, %v115
    %v118 = vmul.f32 %v117, %v116
    %v119 = vmul.f32 0.5, %v118
    %v120 = vsub.f32 1.5, %v119
    %v121 = vmul.f32 %v116, %v120
    %vm122 = vweird.f32 %v115
    %vm123 = vweird.f32 %v116
    %vm124 = vmor %vm122, %vm123
    %v125 = vsel %vm124, %v116, %v121
    %v128 = vunpack.c.l.s4 839922192
    %v129 = vunpack.c.0.s8 %v128
    %v130 = vperm.slane %v125, %v129
    %v132 = vmul.f32 %v88, %v130
    %v133 = vmul.f32 %v89, %v130
    %v134 = vld [vmem:[#allocation5] sm:$0xff]
    %v135 = vld [vmem:[#allocation5 + $0x8] sm:$0xff]
    %v136 = vld [vmem:[#allocation7] sm:$0xff]
    %v137 = vld [vmem:[#allocation7 + $0x8] sm:$0xff]
    %v138 = vmul.f32 %v132, %v134
    %v139 = vmul.f32 %v133, %v135
    %v140 = vadd.f32 %v138, %v136
    %v141 = vadd.f32 %v139, %v137
    %142 = vst [vmem:[#allocation8] sm:$0xff] %v140
    %143 = vst [vmem:[#allocation8 + $0x8] sm:$0xff] %v141
    // Predicated region
    $region26: #{tpu_custom_call.1} parent=1 // pred_check
      _
    $region27: #{tpu_custom_call.1} parent=1 // pred_check_branch
      %145 = sbr.rel (0) target = $region29
    $region28: #{tpu_custom_call.1} parent=1 // pred_region
      %147 = vsyncadd [#allocation4], 0
      %s149 = sshll.u32 [#allocation8], 4
      %s150 = int_to_ptr.vmem [resolvable:$true] %s149
      %s151 = sshll.u32 %s3, 4
      %s152 = int_to_ptr.hbm [resolvable:$true] %s151
      %154 = dma.vmem_to_hbm [thread:$0]  %s150, 256, %s152, [#allocation4]
    $region29: #{tpu_custom_call.1} parent=1 // pred_fallthru
      _
    // Predicated region
    $region30: #{tpu_custom_call.1} parent=1 // pred_check
      _
    $region31: #{tpu_custom_call.1} parent=1 // pred_check_branch
      %156 = sbr.rel (0) target = $region33
    $region32: #{tpu_custom_call.1} parent=1 // pred_region
      %158 = dma.done [#allocation4], 256
    $region33: #{tpu_custom_call.1} parent=1 // pred_fallthru
      _
    %159 = vsyncpa [#allocation3], 1
    %160 = vsyncpa [#allocation6], 1
    %161 = vsyncpa [#allocation4], 1

</llo_original>
